<compile_context>
chip_gen: v7x
topology: tpu7x:2x2x1
jax: 0.10.0
libtpu: 0.0.40
codegen_flags: <defaults>
</compile_context>

<pallas_src>
import functools

import jax
import jax.numpy as jnp
import numpy as np
from jax import lax
from jax.experimental import pallas as pl
from jax.experimental.pallas import tpu as pltpu


def _round_up(v, m):
    return ((v + m - 1) // m) * m


def _ds_conv_kernel(x_ref, wdw_ref, gamma_ref, beta_ref, wpw_ref, o_ref, *,
                    KH, KW, stride, Wp, Ho, Wo, C, Cout, eps):
    # x_ref:     (1, C, XLEN)   zero-padded, row-major flattened (Hp, Wp) spatial
    # wdw_ref:   (C, KH*KW)     depthwise weights, one column per tap
    # gamma_ref: (C, 1)         InstanceNorm affine scale
    # beta_ref:  (C, 1)         InstanceNorm affine shift
    # wpw_ref:   (Cout, C)      pointwise weights (channel-major -> output is NCHW)
    # o_ref:     (1, Cout, Ho*Wo)
    Hc = (Ho - 1) * stride + 1          # padded-grid rows at which conv results are needed
    Lp = Hc * Wp                        # lane-dense working width for the tap phase

    # ---- depthwise conv: KxK taps, each a constant lane-shifted slice of the
    # flattened padded input; fresh per-tap loads from the ref (no big live copy).
    acc = jnp.zeros((C, Lp), jnp.float32)
    for kh in range(KH):
        for kw in range(KW):
            off = kh * Wp + kw
            t = kh * KW + kw
            tap = x_ref[0, :, off:off + Lp].astype(jnp.float32)                  # (C, Lp)
            w_t = wdw_ref[:, t:t + 1].astype(jnp.float32)                        # (C, 1)
            acc = acc + tap * w_t

    # ---- compact padded-width rows -> dense (C, Ho*Wo) so the norm, the MXU
    # matmul and the output store all run lane-dense (no masks needed). ----
    rows = []
    for ho in range(Ho):
        start = ho * stride * Wp
        if stride == 1:
            rows.append(acc[:, start:start + Wo])
        else:
            rows.append(acc[:, start:start + (Wo - 1) * stride + 1:stride])
    y = jnp.concatenate(rows, axis=1) if len(rows) > 1 else rows[0]              # (C, Ho*Wo)

    # ---- InstanceNorm2d: single fused pass for sum / sum-of-squares (f32). ----
    cnt = float(Ho * Wo)
    s1 = jnp.sum(y, axis=1, keepdims=True)                                       # (C, 1)
    s2 = jnp.sum(y * y, axis=1, keepdims=True)                                   # (C, 1)
    mean = s1 / cnt
    var = jnp.maximum(s2 / cnt - mean * mean, 0.0)
    y = (y - mean) * lax.rsqrt(var + eps)
    y = y * gamma_ref[...].astype(jnp.float32) + beta_ref[...].astype(jnp.float32)

    # ---- pointwise 1x1 conv: (Cout, C) x (C, Ho*Wo) on the MXU. Output minor
    # dim = Ho*Wo (multiple of 128 here) -> unmasked stores, already NCHW. ----
    out = jnp.dot(wpw_ref[...], y.astype(wpw_ref.dtype),
                  preferred_element_type=jnp.float32)                            # (Cout, Ho*Wo)
    o_ref[0] = out.astype(o_ref.dtype)


def conv2d_ds(x_nchw, w_dw, gamma, beta, w_pw, *, stride=1, padding=0, eps=1e-5):
    """x_nchw: (N, C, H, W). w_dw: (C, 1, KH, KW). w_pw: (Cout, C, 1, 1)."""
    N, C, H, W = x_nchw.shape
    KH, KW = w_dw.shape[2], w_dw.shape[3]
    Cout = w_pw.shape[0]
    Hp, Wp = H + 2 * padding, W + 2 * padding
    Ho = (Hp - KH) // stride + 1
    Wo = (Wp - KW) // stride + 1

    # Glue (no transposes): zero-pad spatial, flatten row-major, add a small zero
    # tail so every tap's lane-shifted slice stays in bounds.
    Hc = (Ho - 1) * stride + 1
    needed = (KH - 1) * Wp + (KW - 1) + Hc * Wp
    xlen = _round_up(max(needed, Hp * Wp), 128)
    xp = jnp.pad(x_nchw, ((0, 0), (0, 0), (padding, padding), (padding, padding)))
    xf = jnp.pad(xp.reshape(N, C, Hp * Wp), ((0, 0), (0, 0), (0, xlen - Hp * Wp)))

    wdw = w_dw[:, 0, :, :].reshape(C, KH * KW)           # (C, KH*KW), tap-major columns
    wpw = w_pw[:, :, 0, 0]                               # (Cout, C) — no transpose needed
    gamma2 = gamma.reshape(C, 1)
    beta2 = beta.reshape(C, 1)

    kernel = functools.partial(_ds_conv_kernel, KH=KH, KW=KW, stride=stride,
                               Wp=Wp, Ho=Ho, Wo=Wo, C=C, Cout=Cout, eps=eps)

    out_flat = pl.pallas_call(
        kernel,
        out_shape=jax.ShapeDtypeStruct((N, Cout, Ho * Wo), x_nchw.dtype),
        grid_spec=pltpu.PrefetchScalarGridSpec(
            num_scalar_prefetch=0,
            grid=(N,),
            in_specs=[
                pl.BlockSpec((1, C, xlen), lambda n: (n, 0, 0)),
                pl.BlockSpec((C, KH * KW), lambda n: (0, 0)),
                pl.BlockSpec((C, 1), lambda n: (0, 0)),
                pl.BlockSpec((C, 1), lambda n: (0, 0)),
                pl.BlockSpec((Cout, C), lambda n: (0, 0)),
            ],
            out_specs=pl.BlockSpec((1, Cout, Ho * Wo), lambda n: (n, 0, 0)),
        ),
        compiler_params=pltpu.CompilerParams(
            dimension_semantics=("parallel",),
            vmem_limit_bytes=32 * 1024 * 1024),
    )(xf, wdw, gamma2, beta2, wpw)

    # Free reshape back to NCHW — no transpose, no extra HBM pass.
    return out_flat.reshape(N, Cout, Ho, Wo)


def _reference(x_nchw, w_dw, gamma, beta, w_pw, *, stride, padding, eps=1e-5):
    """Pure-JAX reference matching the PyTorch module semantics."""
    C = x_nchw.shape[1]
    y = lax.conv_general_dilated(
        x_nchw, w_dw, window_strides=(stride, stride),
        padding=[(padding, padding), (padding, padding)],
        dimension_numbers=("NCHW", "OIHW", "NCHW"), feature_group_count=C)
    mean = jnp.mean(y, axis=(2, 3), keepdims=True)
    var = jnp.mean((y - mean) ** 2, axis=(2, 3), keepdims=True)
    y = (y - mean) * lax.rsqrt(var + eps)
    y = y * gamma.reshape(1, C, 1, 1) + beta.reshape(1, C, 1, 1)
    return lax.conv_general_dilated(
        y, w_pw, window_strides=(1, 1), padding=[(0, 0), (0, 0)],
        dimension_numbers=("NCHW", "OIHW", "NCHW"))


if __name__ == "__main__":
    # Small config consistent with the module: Conv2d_DS(in=8, out=16, k=3, stride=1, padding=1)
    N, Cin, Cout, H, W = 2, 8, 16, 16, 16
    K, STRIDE, PAD = 3, 1, 1

    key = jax.random.PRNGKey(0)
    kx, kdw, kpw = jax.random.split(key, 3)

    x = jax.random.normal(kx, (N, Cin, H, W), jnp.float32)
    w_dw = jax.random.normal(kdw, (Cin, 1, K, K), jnp.float32) * 0.1     # conv_dw.weight
    gamma = jnp.ones((Cin,), jnp.float32)                                # bn_dw.weight (init 1)
    beta = jnp.zeros((Cin,), jnp.float32)                                # bn_dw.bias  (init 0)
    w_pw = jax.random.normal(kpw, (Cout, Cin, 1, 1), jnp.float32) * 0.1  # conv_pw.weight

    out = conv2d_ds(x, w_dw, gamma, beta, w_pw, stride=STRIDE, padding=PAD)
    out = jax.block_until_ready(out)

    ref = _reference(x, w_dw, gamma, beta, w_pw, stride=STRIDE, padding=PAD)
    np.testing.assert_allclose(np.asarray(out), np.asarray(ref), rtol=1e-4, atol=1e-4)

    print("KERNEL_OK")
</pallas_src>

<mosaic_0001>
module attributes {stable_mosaic.version = 11 : i64} {
  func.func @_ds_conv_kernel(%arg0: i32, %arg1: memref<1x8x384xf32, #tpu.memory_space<vmem>>, %arg2: memref<8x9xf32, #tpu.memory_space<vmem>>, %arg3: memref<8x1xf32, #tpu.memory_space<vmem>>, %arg4: memref<8x1xf32, #tpu.memory_space<vmem>>, %arg5: memref<16x8xf32, #tpu.memory_space<vmem>>, %arg6: memref<1x16x256xf32, #tpu.memory_space<vmem>>) attributes {dimension_semantics = [#tpu.dimension_semantics<parallel>], iteration_bounds = array<i64: 2>, scalar_prefetch = 0 : i64, scratch_operands = 0 : i64, tpu.core_type = #tpu.core_type<tc>, window_params = [{transform_indices = @transform_0, window_bounds = array<i64: 1, 8, 384>}, {pipeline_mode = #tpu.pipeline_mode<synchronous>, transform_indices = @transform_1, window_bounds = array<i64: 8, 9>}, {pipeline_mode = #tpu.pipeline_mode<synchronous>, transform_indices = @transform_2, window_bounds = array<i64: 8, 1>}, {pipeline_mode = #tpu.pipeline_mode<synchronous>, transform_indices = @transform_3, window_bounds = array<i64: 8, 1>}, {pipeline_mode = #tpu.pipeline_mode<synchronous>, transform_indices = @transform_4, window_bounds = array<i64: 16, 8>}, {transform_indices = @transform_5, window_bounds = array<i64: 1, 16, 256>}]} {
    %cst = arith.constant 0.000000e+00 : f32
    %0 = vector.broadcast %cst : f32 to vector<8x288xf32>
    %c0 = arith.constant 0 : index
    %c0_0 = arith.constant 0 : index
    %c0_1 = arith.constant 0 : index
    %1 = vector.load %arg1[%c0, %c0_0, %c0_1] : memref<1x8x384xf32, #tpu.memory_space<vmem>>, vector<1x8x288xf32>
    %2 = vector.shape_cast %1 : vector<1x8x288xf32> to vector<8x288xf32>
    %c0_2 = arith.constant 0 : index
    %c0_3 = arith.constant 0 : index
    %3 = vector.load %arg2[%c0_2, %c0_3] : memref<8x9xf32, #tpu.memory_space<vmem>>, vector<8x1xf32>
    %4 = vector.broadcast %3 : vector<8x1xf32> to vector<8x288xf32>
    %5 = arith.mulf %2, %4 : vector<8x288xf32>
    %6 = arith.addf %0, %5 : vector<8x288xf32>
    %c0_4 = arith.constant 0 : index
    %c0_5 = arith.constant 0 : index
    %c1 = arith.constant 1 : index
    %7 = vector.load %arg1[%c0_4, %c0_5, %c1] : memref<1x8x384xf32, #tpu.memory_space<vmem>>, vector<1x8x288xf32>
    %8 = vector.shape_cast %7 : vector<1x8x288xf32> to vector<8x288xf32>
    %c0_6 = arith.constant 0 : index
    %c1_7 = arith.constant 1 : index
    %9 = vector.load %arg2[%c0_6, %c1_7] : memref<8x9xf32, #tpu.memory_space<vmem>>, vector<8x1xf32>
    %10 = vector.broadcast %9 : vector<8x1xf32> to vector<8x288xf32>
    %11 = arith.mulf %8, %10 : vector<8x288xf32>
    %12 = arith.addf %6, %11 : vector<8x288xf32>
    %c0_8 = arith.constant 0 : index
    %c0_9 = arith.constant 0 : index
    %c2 = arith.constant 2 : index
    %13 = vector.load %arg1[%c0_8, %c0_9, %c2] : memref<1x8x384xf32, #tpu.memory_space<vmem>>, vector<1x8x288xf32>
    %14 = vector.shape_cast %13 : vector<1x8x288xf32> to vector<8x288xf32>
    %c0_10 = arith.constant 0 : index
    %c2_11 = arith.constant 2 : index
    %15 = vector.load %arg2[%c0_10, %c2_11] : memref<8x9xf32, #tpu.memory_space<vmem>>, vector<8x1xf32>
    %16 = vector.broadcast %15 : vector<8x1xf32> to vector<8x288xf32>
    %17 = arith.mulf %14, %16 : vector<8x288xf32>
    %18 = arith.addf %12, %17 : vector<8x288xf32>
    %c0_12 = arith.constant 0 : index
    %c0_13 = arith.constant 0 : index
    %c18 = arith.constant 18 : index
    %19 = vector.load %arg1[%c0_12, %c0_13, %c18] : memref<1x8x384xf32, #tpu.memory_space<vmem>>, vector<1x8x288xf32>
    %20 = vector.shape_cast %19 : vector<1x8x288xf32> to vector<8x288xf32>
    %c0_14 = arith.constant 0 : index
    %c3 = arith.constant 3 : index
    %21 = vector.load %arg2[%c0_14, %c3] : memref<8x9xf32, #tpu.memory_space<vmem>>, vector<8x1xf32>
    %22 = vector.broadcast %21 : vector<8x1xf32> to vector<8x288xf32>
    %23 = arith.mulf %20, %22 : vector<8x288xf32>
    %24 = arith.addf %18, %23 : vector<8x288xf32>
    %c0_15 = arith.constant 0 : index
    %c0_16 = arith.constant 0 : index
    %c19 = arith.constant 19 : index
    %25 = vector.load %arg1[%c0_15, %c0_16, %c19] : memref<1x8x384xf32, #tpu.memory_space<vmem>>, vector<1x8x288xf32>
    %26 = vector.shape_cast %25 : vector<1x8x288xf32> to vector<8x288xf32>
    %c0_17 = arith.constant 0 : index
    %c4 = arith.constant 4 : index
    %27 = vector.load %arg2[%c0_17, %c4] : memref<8x9xf32, #tpu.memory_space<vmem>>, vector<8x1xf32>
    %28 = vector.broadcast %27 : vector<8x1xf32> to vector<8x288xf32>
    %29 = arith.mulf %26, %28 : vector<8x288xf32>
    %30 = arith.addf %24, %29 : vector<8x288xf32>
    %c0_18 = arith.constant 0 : index
    %c0_19 = arith.constant 0 : index
    %c20 = arith.constant 20 : index
    %31 = vector.load %arg1[%c0_18, %c0_19, %c20] : memref<1x8x384xf32, #tpu.memory_space<vmem>>, vector<1x8x288xf32>
    %32 = vector.shape_cast %31 : vector<1x8x288xf32> to vector<8x288xf32>
    %c0_20 = arith.constant 0 : index
    %c5 = arith.constant 5 : index
    %33 = vector.load %arg2[%c0_20, %c5] : memref<8x9xf32, #tpu.memory_space<vmem>>, vector<8x1xf32>
    %34 = vector.broadcast %33 : vector<8x1xf32> to vector<8x288xf32>
    %35 = arith.mulf %32, %34 : vector<8x288xf32>
    %36 = arith.addf %30, %35 : vector<8x288xf32>
    %c0_21 = arith.constant 0 : index
    %c0_22 = arith.constant 0 : index
    %c36 = arith.constant 36 : index
    %37 = vector.load %arg1[%c0_21, %c0_22, %c36] : memref<1x8x384xf32, #tpu.memory_space<vmem>>, vector<1x8x288xf32>
    %38 = vector.shape_cast %37 : vector<1x8x288xf32> to vector<8x288xf32>
    %c0_23 = arith.constant 0 : index
    %c6 = arith.constant 6 : index
    %39 = vector.load %arg2[%c0_23, %c6] : memref<8x9xf32, #tpu.memory_space<vmem>>, vector<8x1xf32>
    %40 = vector.broadcast %39 : vector<8x1xf32> to vector<8x288xf32>
    %41 = arith.mulf %38, %40 : vector<8x288xf32>
    %42 = arith.addf %36, %41 : vector<8x288xf32>
    %c0_24 = arith.constant 0 : index
    %c0_25 = arith.constant 0 : index
    %c37 = arith.constant 37 : index
    %43 = vector.load %arg1[%c0_24, %c0_25, %c37] : memref<1x8x384xf32, #tpu.memory_space<vmem>>, vector<1x8x288xf32>
    %44 = vector.shape_cast %43 : vector<1x8x288xf32> to vector<8x288xf32>
    %c0_26 = arith.constant 0 : index
    %c7 = arith.constant 7 : index
    %45 = vector.load %arg2[%c0_26, %c7] : memref<8x9xf32, #tpu.memory_space<vmem>>, vector<8x1xf32>
    %46 = vector.broadcast %45 : vector<8x1xf32> to vector<8x288xf32>
    %47 = arith.mulf %44, %46 : vector<8x288xf32>
    %48 = arith.addf %42, %47 : vector<8x288xf32>
    %c0_27 = arith.constant 0 : index
    %c0_28 = arith.constant 0 : index
    %c38 = arith.constant 38 : index
    %49 = vector.load %arg1[%c0_27, %c0_28, %c38] : memref<1x8x384xf32, #tpu.memory_space<vmem>>, vector<1x8x288xf32>
    %50 = vector.shape_cast %49 : vector<1x8x288xf32> to vector<8x288xf32>
    %c0_29 = arith.constant 0 : index
    %c8 = arith.constant 8 : index
    %51 = vector.load %arg2[%c0_29, %c8] : memref<8x9xf32, #tpu.memory_space<vmem>>, vector<8x1xf32>
    %52 = vector.broadcast %51 : vector<8x1xf32> to vector<8x288xf32>
    %53 = arith.mulf %50, %52 : vector<8x288xf32>
    %54 = arith.addf %48, %53 : vector<8x288xf32>
    %55 = vector.extract_strided_slice %54 {offsets = [0, 0], sizes = [8, 16], strides = [1, 1]} : vector<8x288xf32> to vector<8x16xf32>
    %56 = vector.extract_strided_slice %54 {offsets = [0, 18], sizes = [8, 16], strides = [1, 1]} : vector<8x288xf32> to vector<8x16xf32>
    %57 = vector.extract_strided_slice %54 {offsets = [0, 36], sizes = [8, 16], strides = [1, 1]} : vector<8x288xf32> to vector<8x16xf32>
    %58 = vector.extract_strided_slice %54 {offsets = [0, 54], sizes = [8, 16], strides = [1, 1]} : vector<8x288xf32> to vector<8x16xf32>
    %59 = vector.extract_strided_slice %54 {offsets = [0, 72], sizes = [8, 16], strides = [1, 1]} : vector<8x288xf32> to vector<8x16xf32>
    %60 = vector.extract_strided_slice %54 {offsets = [0, 90], sizes = [8, 16], strides = [1, 1]} : vector<8x288xf32> to vector<8x16xf32>
    %61 = vector.extract_strided_slice %54 {offsets = [0, 108], sizes = [8, 16], strides = [1, 1]} : vector<8x288xf32> to vector<8x16xf32>
    %62 = vector.extract_strided_slice %54 {offsets = [0, 126], sizes = [8, 16], strides = [1, 1]} : vector<8x288xf32> to vector<8x16xf32>
    %63 = vector.extract_strided_slice %54 {offsets = [0, 144], sizes = [8, 16], strides = [1, 1]} : vector<8x288xf32> to vector<8x16xf32>
    %64 = vector.extract_strided_slice %54 {offsets = [0, 162], sizes = [8, 16], strides = [1, 1]} : vector<8x288xf32> to vector<8x16xf32>
    %65 = vector.extract_strided_slice %54 {offsets = [0, 180], sizes = [8, 16], strides = [1, 1]} : vector<8x288xf32> to vector<8x16xf32>
    %66 = vector.extract_strided_slice %54 {offsets = [0, 198], sizes = [8, 16], strides = [1, 1]} : vector<8x288xf32> to vector<8x16xf32>
    %67 = vector.extract_strided_slice %54 {offsets = [0, 216], sizes = [8, 16], strides = [1, 1]} : vector<8x288xf32> to vector<8x16xf32>
    %68 = vector.extract_strided_slice %54 {offsets = [0, 234], sizes = [8, 16], strides = [1, 1]} : vector<8x288xf32> to vector<8x16xf32>
    %69 = vector.extract_strided_slice %54 {offsets = [0, 252], sizes = [8, 16], strides = [1, 1]} : vector<8x288xf32> to vector<8x16xf32>
    %70 = vector.extract_strided_slice %54 {offsets = [0, 270], sizes = [8, 16], strides = [1, 1]} : vector<8x288xf32> to vector<8x16xf32>
    %71 = tpu.concatenate %55, %56, %57, %58, %59, %60, %61, %62, %63, %64, %65, %66, %67, %68, %69, %70 in 1 : vector<8x16xf32>, vector<8x16xf32>, vector<8x16xf32>, vector<8x16xf32>, vector<8x16xf32>, vector<8x16xf32>, vector<8x16xf32>, vector<8x16xf32>, vector<8x16xf32>, vector<8x16xf32>, vector<8x16xf32>, vector<8x16xf32>, vector<8x16xf32>, vector<8x16xf32>, vector<8x16xf32>, vector<8x16xf32> -> vector<8x256xf32>
    %cst_30 = arith.constant dense<0.000000e+00> : vector<8xf32>
    %72 = vector.multi_reduction <add>, %71, %cst_30 [1] : vector<8x256xf32> to vector<8xf32>
    %73 = vector.shape_cast %72 : vector<8xf32> to vector<8x1xf32>
    %74 = arith.mulf %71, %71 : vector<8x256xf32>
    %cst_31 = arith.constant dense<0.000000e+00> : vector<8xf32>
    %75 = vector.multi_reduction <add>, %74, %cst_31 [1] : vector<8x256xf32> to vector<8xf32>
    %76 = vector.shape_cast %75 : vector<8xf32> to vector<8x1xf32>
    %cst_32 = arith.constant 2.560000e+02 : f32
    %77 = vector.broadcast %cst_32 : f32 to vector<8x1xf32>
    %78 = arith.divf %73, %77 : vector<8x1xf32>
    %cst_33 = arith.constant 2.560000e+02 : f32
    %79 = vector.broadcast %cst_33 : f32 to vector<8x1xf32>
    %80 = arith.divf %76, %79 : vector<8x1xf32>
    %81 = arith.mulf %78, %78 : vector<8x1xf32>
    %82 = arith.subf %80, %81 : vector<8x1xf32>
    %cst_34 = arith.constant 0.000000e+00 : f32
    %83 = vector.broadcast %cst_34 : f32 to vector<8x1xf32>
    %84 = arith.maximumf %82, %83 : vector<8x1xf32>
    %85 = vector.broadcast %78 : vector<8x1xf32> to vector<8x256xf32>
    %86 = arith.subf %71, %85 : vector<8x256xf32>
    %cst_35 = arith.constant 9.99999974E-6 : f32
    %87 = vector.broadcast %cst_35 : f32 to vector<8x1xf32>
    %88 = arith.addf %84, %87 : vector<8x1xf32>
    %89 = math.rsqrt %88 : vector<8x1xf32>
    %90 = vector.broadcast %89 : vector<8x1xf32> to vector<8x256xf32>
    %91 = arith.mulf %86, %90 : vector<8x256xf32>
    %c0_36 = arith.constant 0 : index
    %c0_37 = arith.constant 0 : index
    %92 = vector.load %arg3[%c0_36, %c0_37] : memref<8x1xf32, #tpu.memory_space<vmem>>, vector<8x1xf32>
    %93 = vector.broadcast %92 : vector<8x1xf32> to vector<8x256xf32>
    %94 = arith.mulf %91, %93 : vector<8x256xf32>
    %c0_38 = arith.constant 0 : index
    %c0_39 = arith.constant 0 : index
    %95 = vector.load %arg4[%c0_38, %c0_39] : memref<8x1xf32, #tpu.memory_space<vmem>>, vector<8x1xf32>
    %96 = vector.broadcast %95 : vector<8x1xf32> to vector<8x256xf32>
    %97 = arith.addf %94, %96 : vector<8x256xf32>
    %c0_40 = arith.constant 0 : index
    %c0_41 = arith.constant 0 : index
    %98 = vector.load %arg5[%c0_40, %c0_41] : memref<16x8xf32, #tpu.memory_space<vmem>>, vector<16x8xf32>
    %cst_42 = arith.constant dense<0.000000e+00> : vector<16x256xf32>
    %99 = tpu.matmul %98, %97, %cst_42 {dimension_numbers = #tpu.dot_dimension_numbers<[1], [0], [0], [1], [0, 0, 1, 1], [], []>} : vector<16x8xf32>, vector<8x256xf32>, vector<16x256xf32> -> vector<16x256xf32>
    %c0_43 = arith.constant 0 : index
    %c0_44 = arith.constant 0 : index
    %c0_45 = arith.constant 0 : index
    %100 = vector.load %arg6[%c0_43, %c0_44, %c0_45] : memref<1x16x256xf32, #tpu.memory_space<vmem>>, vector<1x16x256xf32>
    %101 = vector.shape_cast %100 : vector<1x16x256xf32> to vector<16x256xf32>
    %102 = vector.shape_cast %99 : vector<16x256xf32> to vector<1x16x256xf32>
    tpu.vector_store %arg6[%c0_43, %c0_44, %c0_45], %102 {strides = array<i32>} : memref<1x16x256xf32, #tpu.memory_space<vmem>>, vector<1x16x256xf32>,
    return
  }
  func.func @transform_0(%arg0: i32) -> (i32, i32, i32) {
    %c0_i32 = arith.constant 0 : i32
    %c0_i32_0 = arith.constant 0 : i32
    %c0_i32_1 = arith.constant 0 : i32
    return %arg0, %c0_i32, %c0_i32_0 : i32, i32, i32
  }
  func.func @transform_1(%arg0: i32) -> (i32, i32) {
    %c0_i32 = arith.constant 0 : i32
    %c0_i32_0 = arith.constant 0 : i32
    %c0_i32_1 = arith.constant 0 : i32
    return %c0_i32, %c0_i32_0 : i32, i32
  }
  func.func @transform_2(%arg0: i32) -> (i32, i32) {
    %c0_i32 = arith.constant 0 : i32
    %c0_i32_0 = arith.constant 0 : i32
    %c0_i32_1 = arith.constant 0 : i32
    return %c0_i32, %c0_i32_0 : i32, i32
  }
  func.func @transform_3(%arg0: i32) -> (i32, i32) {
    %c0_i32 = arith.constant 0 : i32
    %c0_i32_0 = arith.constant 0 : i32
    %c0_i32_1 = arith.constant 0 : i32
    return %c0_i32, %c0_i32_0 : i32, i32
  }
  func.func @transform_4(%arg0: i32) -> (i32, i32) {
    %c0_i32 = arith.constant 0 : i32
    %c0_i32_0 = arith.constant 0 : i32
    %c0_i32_1 = arith.constant 0 : i32
    return %c0_i32, %c0_i32_0 : i32, i32
  }
  func.func @transform_5(%arg0: i32) -> (i32, i32, i32) {
    %c0_i32 = arith.constant 0 : i32
    %c0_i32_0 = arith.constant 0 : i32
    %c0_i32_1 = arith.constant 0 : i32
    return %arg0, %c0_i32, %c0_i32_0 : i32, i32, i32
  }
}

</mosaic_0001>

<llo_original>
// kernel: tpu_custom_call.1
$region0: #{tpu_custom_call.1}
  #allocation0 [shape = 'u32[]', space=smem, size = 0x4, offset = 0x4, fixed_abs, tag = 'smem constant byte address 0x4 - core index']
  #allocation1 [shape = 'u32[144,128]{1,0:T(1,128)}', space=vmem, size = 0x12000, scoped, tag = 'internal scratch']
  %s0 = inlined_call_operand.hbm [shape: f32[2,8,384], index: 0, kind: input, shape index: {}]
  %s1 = inlined_call_operand.vmem [shape: f32[8,9], index: 1, kind: input, shape index: {}]
  %s2 = inlined_call_operand.vmem [shape: f32[8,1], index: 2, kind: input, shape index: {}]
  %s3 = inlined_call_operand.vmem [shape: f32[8,1], index: 3, kind: input, shape index: {}]
  %s4 = inlined_call_operand.vmem [shape: f32[16,8], index: 4, kind: input, shape index: {}]
  %s5 = inlined_call_operand.hbm [shape: f32[2,16,256], index: 5, kind: output, shape index: {}]
  %s6 = sld [smem:[#allocation0]]
  $region57: #{tpu_custom_call.1} parent=0
    _
  %s8 = ssub.s32 1, %s6
  %s9 = scalar_select 0, %s8, %s6
  $region1: #{tpu_custom_call.1} parent=0
    #allocation2 [shape = 'u8[24576]{0}', space=vmem, size = 0x6000, scoped, tag = 'input window, operand 0']
    #allocation3 [shape = 's32[2]{0}', space=sflag, size = 0x8, scoped, tag = 'scoped memory for tpu_custom_call.1']
    #allocation4 [shape = 's32[2]{0}', space=sflag, size = 0x8, scoped, tag = 'scoped memory for tpu_custom_call.1']
    #allocation5 [shape = 'u8[32768]{0}', space=vmem, size = 0x8000, scoped, tag = 'output window, operand 0']
    %10 = vsyncpa [#allocation3], 0
    %s11 = scalar_lea.sflag [#allocation3], 1
    %12 = vsyncpa %s11, 0
    %13 = vsyncpa [#allocation4], 0
    %s14 = scalar_lea.sflag [#allocation4], 1
    %15 = vsyncpa %s14, 0
    loop: start=0, step=1, limit=4
    $region2: #{tpu_custom_call.1} parent=1 // loop_pre_header
      _
    $region3: #{tpu_custom_call.1} parent=1 // loop_header
      %s17 = sphi 0, %s21
      %p18 = scmp.ge.s32.totalorder %s17, 4
      %s27 = sphi 0, %s29
      %s30 = sphi 0, %s27
      %s31 = sphi 0, %s30
      %s47 = sphi 0, %s31
      %s51 = sphi 0, %s51
      %s53 = sphi 0, %s51
      %s54 = sphi 0, %s53
      %s68 = sphi 0, %s54
      %s72 = sphi 0, %s72
      %s74 = sphi 0, %s72
      %s75 = sphi 0, %s74
      %s89 = sphi 0, %s75
      %s93 = sphi 0, %s93
      %s95 = sphi 0, %s93
      %s96 = sphi 0, %s95
      %s110 = sphi 0, %s96
      %s114 = sphi 0, %s114
      %s116 = sphi 0, %s114
      %s117 = sphi 0, %s116
      %s131 = sphi 0, %s117
      %s137 = sphi 0, %s139
      %s140 = sphi 0, %s137
      %s141 = sphi 0, %s140
      %s157 = sphi 0, %s141
    $region4: #{tpu_custom_call.1} parent=1 // loop_header_branch
      %20 = sbr.rel (%p18) target = $region8
    $region5: #{tpu_custom_call.1} parent=1 // loop_body
      %s22 = ssub.s32 %s17, 1
      %s23 = ssub.s32 %s17, 2
      %s24 = sadd.s32 %s17, 1
      %s25 = ssub.s32 %s17, %s24
      %p26 = scmp.eq.s32.totalorder %s25, 0
      %s28 = sadd.s32 %s27, 1
      %s29 = scalar_select %p26, %s27, %s28
      %p32 = pneg %p26
      %p33 = scmp.eq.s32.totalorder %s17, 1
      %p34 = por %p32, %p33
      %p35 = scmp.ne.s32.totalorder %s27, %s30
      %p36 = scmp.eq.s32.totalorder %s17, 0
      %p37 = por %p35, %p36
      %p38 = scmp.ne.s32.totalorder %s27, %s30
      %p39 = scmp.eq.s32.totalorder %s22, 1
      %p40 = por %p38, %p39
      %p41 = scmp.ne.s32.totalorder %s30, %s31
      %p42 = scmp.eq.s32.totalorder %s22, 0
      %p43 = por %p41, %p42
      %p44 = scmp.ne.s32.totalorder %s30, %s31
      %p45 = scmp.eq.s32.totalorder %s23, 1
      %p46 = por %p44, %p45
      %p48 = scmp.ne.s32.totalorder %s31, %s47
      %p49 = scmp.eq.s32.totalorder %s23, 0
      %p50 = por %p48, %p49
      %s52 = sadd.s32 %s51, 1
      %p55 = scmp.eq.s32.totalorder %s17, 1
      %p56 = scmp.ne.s32.totalorder %s51, %s53
      %p57 = scmp.eq.s32.totalorder %s17, 0
      %p58 = por %p56, %p57
      %p59 = scmp.ne.s32.totalorder %s51, %s53
      %p60 = scmp.eq.s32.totalorder %s22, 1
      %p61 = por %p59, %p60
      %p62 = scmp.ne.s32.totalorder %s53, %s54
      %p63 = scmp.eq.s32.totalorder %s22, 0
      %p64 = por %p62, %p63
      %p65 = scmp.ne.s32.totalorder %s53, %s54
      %p66 = scmp.eq.s32.totalorder %s23, 1
      %p67 = por %p65, %p66
      %p69 = scmp.ne.s32.totalorder %s54, %s68
      %p70 = scmp.eq.s32.totalorder %s23, 0
      %p71 = por %p69, %p70
      %s73 = sadd.s32 %s72, 1
      %p76 = scmp.eq.s32.totalorder %s17, 1
      %p77 = scmp.ne.s32.totalorder %s72, %s74
      %p78 = scmp.eq.s32.totalorder %s17, 0
      %p79 = por %p77, %p78
      %p80 = scmp.ne.s32.totalorder %s72, %s74
      %p81 = scmp.eq.s32.totalorder %s22, 1
      %p82 = por %p80, %p81
      %p83 = scmp.ne.s32.totalorder %s74, %s75
      %p84 = scmp.eq.s32.totalorder %s22, 0
      %p85 = por %p83, %p84
      %p86 = scmp.ne.s32.totalorder %s74, %s75
      %p87 = scmp.eq.s32.totalorder %s23, 1
      %p88 = por %p86, %p87
      %p90 = scmp.ne.s32.totalorder %s75, %s89
      %p91 = scmp.eq.s32.totalorder %s23, 0
      %p92 = por %p90, %p91
      %s94 = sadd.s32 %s93, 1
      %p97 = scmp.eq.s32.totalorder %s17, 1
      %p98 = scmp.ne.s32.totalorder %s93, %s95
      %p99 = scmp.eq.s32.totalorder %s17, 0
      %p100 = por %p98, %p99
      %p101 = scmp.ne.s32.totalorder %s93, %s95
      %p102 = scmp.eq.s32.totalorder %s22, 1
      %p103 = por %p101, %p102
      %p104 = scmp.ne.s32.totalorder %s95, %s96
      %p105 = scmp.eq.s32.totalorder %s22, 0
      %p106 = por %p104, %p105
      %p107 = scmp.ne.s32.totalorder %s95, %s96
      %p108 = scmp.eq.s32.totalorder %s23, 1
      %p109 = por %p107, %p108
      %p111 = scmp.ne.s32.totalorder %s96, %s110
      %p112 = scmp.eq.s32.totalorder %s23, 0
      %p113 = por %p111, %p112
      %s115 = sadd.s32 %s114, 1
      %p118 = scmp.eq.s32.totalorder %s17, 1
      %p119 = scmp.ne.s32.totalorder %s114, %s116
      %p120 = scmp.eq.s32.totalorder %s17, 0
      %p121 = por %p119, %p120
      %p122 = scmp.ne.s32.totalorder %s114, %s116
      %p123 = scmp.eq.s32.totalorder %s22, 1
      %p124 = por %p122, %p123
      %p125 = scmp.ne.s32.totalorder %s116, %s117
      %p126 = scmp.eq.s32.totalorder %s22, 0
      %p127 = por %p125, %p126
      %p128 = scmp.ne.s32.totalorder %s116, %s117
      %p129 = scmp.eq.s32.totalorder %s23, 1
      %p130 = por %p128, %p129
      %p132 = scmp.ne.s32.totalorder %s117, %s131
      %p133 = scmp.eq.s32.totalorder %s23, 0
      %p134 = por %p132, %p133
      %s135 = ssub.s32 %s17, %s24
      %p136 = scmp.eq.s32.totalorder %s135, 0
      %s138 = sadd.s32 %s137, 1
      %s139 = scalar_select %p136, %s137, %s138
      %p142 = pneg %p136
      %p143 = scmp.eq.s32.totalorder %s17, 1
      %p144 = por %p142, %p143
      %p145 = scmp.ne.s32.totalorder %s137, %s140
      %p146 = scmp.eq.s32.totalorder %s17, 0
      %p147 = por %p145, %p146
      %p148 = scmp.ne.s32.totalorder %s137, %s140
      %p149 = scmp.eq.s32.totalorder %s22, 1
      %p150 = por %p148, %p149
      %p151 = scmp.ne.s32.totalorder %s140, %s141
      %p152 = scmp.eq.s32.totalorder %s22, 0
      %p153 = por %p151, %p152
      %p154 = scmp.ne.s32.totalorder %s140, %s141
      %p155 = scmp.eq.s32.totalorder %s23, 1
      %p156 = por %p154, %p155
      %p158 = scmp.ne.s32.totalorder %s141, %s157
      %p159 = scmp.eq.s32.totalorder %s23, 0
      %p160 = por %p158, %p159
      %p161 = scmp.le.s32.totalorder 1, %s17
      %p162 = scmp.lt.s32.totalorder %s17, 3
      %p163 = pnand %p161, %p162
      %p164 = pneg %p163
      // Predicated region
      $region9: #{tpu_custom_call.1} parent=5 // pred_check
        _
      $region10: #{tpu_custom_call.1} parent=5 // pred_check_branch
        %166 = sbr.rel (%p163) target = $region12
      $region11: #{tpu_custom_call.1} parent=5 // pred_region
        %s167 = ssub.s32 %s17, 1
        // Predicated region
        $region13: #{tpu_custom_call.1} parent=11 // pred_check
          %p168 = pneg %p64
        $region14: #{tpu_custom_call.1} parent=11 // pred_check_branch
          %170 = sbr.rel (%p168) target = $region16
        $region15: #{tpu_custom_call.1} parent=11 // pred_region
          _
        $region16: #{tpu_custom_call.1} parent=11 // pred_fallthru
          _
        // Predicated region
        $region17: #{tpu_custom_call.1} parent=11 // pred_check
          %p171 = pneg %p85
        $region18: #{tpu_custom_call.1} parent=11 // pred_check_branch
          %173 = sbr.rel (%p171) target = $region20
        $region19: #{tpu_custom_call.1} parent=11 // pred_region
          _
        $region20: #{tpu_custom_call.1} parent=11 // pred_fallthru
          _
        // Predicated region
        $region21: #{tpu_custom_call.1} parent=11 // pred_check
          %p174 = pneg %p106
        $region22: #{tpu_custom_call.1} parent=11 // pred_check_branch
          %176 = sbr.rel (%p174) target = $region24
        $region23: #{tpu_custom_call.1} parent=11 // pred_region
          _
        $region24: #{tpu_custom_call.1} parent=11 // pred_fallthru
          _
        // Predicated region
        $region25: #{tpu_custom_call.1} parent=11 // pred_check
          %p177 = pneg %p127
        $region26: #{tpu_custom_call.1} parent=11 // pred_check_branch
          %179 = sbr.rel (%p177) target = $region28
        $region27: #{tpu_custom_call.1} parent=11 // pred_region
          _
        $region28: #{tpu_custom_call.1} parent=11 // pred_fallthru
          _
      $region12: #{tpu_custom_call.1} parent=5 // pred_fallthru
        _
      %p180 = scmp.lt.s32.totalorder %s17, 2
      // Predicated region
      $region29: #{tpu_custom_call.1} parent=5 // pred_check
        %p181 = pneg %p180
      $region30: #{tpu_custom_call.1} parent=5 // pred_check_branch
        %183 = sbr.rel (%p181) target = $region32
      $region31: #{tpu_custom_call.1} parent=5 // pred_region
        // Predicated region
        $region33: #{tpu_custom_call.1} parent=31 // pred_check
          %p184 = pneg %p37
        $region34: #{tpu_custom_call.1} parent=31 // pred_check_branch
          %186 = sbr.rel (%p184) target = $region36
        $region35: #{tpu_custom_call.1} parent=31 // pred_region
          %s187 = sand.u32 %s27, 1
          %s188 = scalar_lea.sflag [#allocation3], %s187
          %s189 = sand.u32 %s27, 1
          %s190 = smul.addr %s189, 24
          %s191 = scalar_lea.vmem [#allocation2], %s190
          %s193 = ssub.s32 384, 384
          %194 = vsyncadd %s188, %s193
          %s195 = smul.addr %s17, 3
          %s196 = smul.addr %s195, 128
          %s197 = scalar_lea.hbm %s0, %s196
          %s199 = sshll.u32 %s191, 4
          %s200 = int_to_ptr.vmem [resolvable:$true] %s199
          %202 = dma.hbm_to_vmem [thread:$0]  %s197, 384, %s200, %s188
        $region36: #{tpu_custom_call.1} parent=31 // pred_fallthru
          _
      $region32: #{tpu_custom_call.1} parent=5 // pred_fallthru
        _
      %p203 = scmp.le.s32.totalorder 1, %s17
      %p204 = scmp.lt.s32.totalorder %s17, 3
      %p205 = pnand %p203, %p204
      %p206 = pneg %p205
      // Predicated region
      $region37: #{tpu_custom_call.1} parent=5 // pred_check
        _
      $region38: #{tpu_custom_call.1} parent=5 // pred_check_branch
        %208 = sbr.rel (%p205) target = $region40
      $region39: #{tpu_custom_call.1} parent=5 // pred_region
        %s209 = ssub.s32 %s17, 1
        %s210 = sand.u32 %s30, 1
        %s211 = scalar_lea.sflag [#allocation3], %s210
        %s212 = sand.u32 %s30, 1
        %s213 = smul.addr %s212, 24
        %s214 = scalar_lea.vmem [#allocation2], %s213
        // Predicated region
        $region41: #{tpu_custom_call.1} parent=39 // pred_check
          %p215 = pneg %p43
        $region42: #{tpu_custom_call.1} parent=39 // pred_check_branch
          %217 = sbr.rel (%p215) target = $region44
        $region43: #{tpu_custom_call.1} parent=39 // pred_region
          %218 = dma.done %s211, 384
        $region44: #{tpu_custom_call.1} parent=39 // pred_fallthru
          _
        %s219 = sand.u32 %s30, 1
        %s220 = scalar_lea.sflag [#allocation3], %s219
        %s221 = sand.u32 %s30, 1
        %s222 = smul.addr %s221, 24
        %s223 = scalar_lea.vmem [#allocation2], %s222
        %p224 = pneg %p43
        %p225 = pneg %p40
        %p226 = pneg %p64
        %p227 = pneg %p61
        %p228 = pneg %p85
        %p229 = pneg %p82
        %p230 = pneg %p106
        %p231 = pneg %p103
        %p232 = pneg %p127
        %p233 = pneg %p124
        %p234 = pneg %p153
        %p235 = pneg %p150
        %s236 = sand.u32 %s140, 1
        %s237 = scalar_lea.sflag [#allocation4], %s236
        %s238 = sand.u32 %s140, 1
        %s239 = smul.addr %s238, 32
        %s240 = scalar_lea.vmem [#allocation5], %s239
        %v241 = vld [vmem:[%s214] sm:$0xff]
        %v242 = vld [vmem:[%s214 + $0x8] sm:$0xff]
        %v243 = vld [vmem:[%s214 + $0x10] sm:$0xff]
        %v244 = vld [vmem:[%s1] sm:$0xff]
        %246 = vset.pattern.permute.xlu0 0
        %247 = vperm.xlu0 %246, %v244
        %v248 = vpop.permute.xlu0 %247
        %v250 = vmul.f32 %v241, %v248
        %v251 = vmul.f32 %v242, %v248
        %v252 = vmul.f32 %v243, %v248
        %v253 = vadd.f32 %v250, 0.0
        %v254 = vadd.f32 %v251, 0.0
        %v255 = vadd.f32 %v252, 0.0
        %256 = vset.pattern.permute.xlu0 1
        %257 = vperm.xlu0 %256, %v244
        %v258 = vpop.permute.xlu0 %257
        %v260 = vmul.f32 %v241, %v258
        %v261 = vmul.f32 %v242, %v258
        %v262 = vmul.f32 %v243, %v258
        %266 = vrot.lane.b32.xlu0 %v260, 127
        %v267 = vpop.permute.xlu0 %266
        %268 = vrot.lane.b32.xlu0 %v261, 127
        %v269 = vpop.permute.xlu0 %268
        %270 = vrot.lane.b32.xlu0 %v262, 127
        %v271 = vpop.permute.xlu0 %270
        %vm272 = vcmask 1039360
        %v273 = vsel %vm272, %v267, %v269
        %v274 = vsel %vm272, %v269, %v271
        %v278 = vadd.f32 %v253, %v273
        %v279 = vadd.f32 %v254, %v274
        %v280 = vadd.f32 %v255, %v271
        %281 = vset.pattern.permute.xlu0 2
        %282 = vperm.xlu0 %281, %v244
        %v283 = vpop.permute.xlu0 %282
        %v285 = vmul.f32 %v241, %v283
        %v286 = vmul.f32 %v242, %v283
        %v287 = vmul.f32 %v243, %v283
        %291 = vrot.lane.b32.xlu0 %v285, 126
        %v292 = vpop.permute.xlu0 %291
        %293 = vrot.lane.b32.xlu0 %v286, 126
        %v294 = vpop.permute.xlu0 %293
        %295 = vrot.lane.b32.xlu0 %v287, 126
        %v296 = vpop.permute.xlu0 %295
        %vm297 = vcmask 1031168
        %v298 = vsel %vm297, %v292, %v294
        %v299 = vsel %vm297, %v294, %v296
        %v303 = vadd.f32 %v278, %v298
        %v304 = vadd.f32 %v279, %v299
        %v305 = vadd.f32 %v280, %v296
        %306 = vset.pattern.permute.xlu0 3
        %307 = vperm.xlu0 %306, %v244
        %v308 = vpop.permute.xlu0 %307
        %v310 = vmul.f32 %v241, %v308
        %v311 = vmul.f32 %v242, %v308
        %v312 = vmul.f32 %v243, %v308
        %316 = vrot.lane.b32.xlu0 %v310, 110
        %v317 = vpop.permute.xlu0 %316
        %318 = vrot.lane.b32.xlu0 %v311, 110
        %v319 = vpop.permute.xlu0 %318
        %320 = vrot.lane.b32.xlu0 %v312, 110
        %v321 = vpop.permute.xlu0 %320
        %vm322 = vcmask 900096
        %v323 = vsel %vm322, %v317, %v319
        %v324 = vsel %vm322, %v319, %v321
        %v328 = vadd.f32 %v303, %v323
        %v329 = vadd.f32 %v304, %v324
        %v330 = vadd.f32 %v305, %v321
        %331 = vset.pattern.permute.xlu0 4
        %332 = vperm.xlu0 %331, %v244
        %v333 = vpop.permute.xlu0 %332
        %v335 = vmul.f32 %v241, %v333
        %v336 = vmul.f32 %v242, %v333
        %v337 = vmul.f32 %v243, %v333
        %341 = vrot.lane.b32.xlu0 %v335, 109
        %v342 = vpop.permute.xlu0 %341
        %343 = vrot.lane.b32.xlu0 %v336, 109
        %v344 = vpop.permute.xlu0 %343
        %345 = vrot.lane.b32.xlu0 %v337, 109
        %v346 = vpop.permute.xlu0 %345
        %vm347 = vcmask 891904
        %v348 = vsel %vm347, %v342, %v344
        %v349 = vsel %vm347, %v344, %v346
        %v353 = vadd.f32 %v328, %v348
        %v354 = vadd.f32 %v329, %v349
        %v355 = vadd.f32 %v330, %v346
        %356 = vset.pattern.permute.xlu0 5
        %357 = vperm.xlu0 %356, %v244
        %v358 = vpop.permute.xlu0 %357
        %v360 = vmul.f32 %v241, %v358
        %v361 = vmul.f32 %v242, %v358
        %v362 = vmul.f32 %v243, %v358
        %366 = vrot.lane.b32.xlu0 %v360, 108
        %v367 = vpop.permute.xlu0 %366
        %368 = vrot.lane.b32.xlu0 %v361, 108
        %v369 = vpop.permute.xlu0 %368
        %370 = vrot.lane.b32.xlu0 %v362, 108
        %v371 = vpop.permute.xlu0 %370
        %vm372 = vcmask 883712
        %v373 = vsel %vm372, %v367, %v369
        %v374 = vsel %vm372, %v369, %v371
        %v378 = vadd.f32 %v353, %v373
        %v379 = vadd.f32 %v354, %v374
        %v380 = vadd.f32 %v355, %v371
        %381 = vset.pattern.permute.xlu0 6
        %382 = vperm.xlu0 %381, %v244
        %v383 = vpop.permute.xlu0 %382
        %v385 = vmul.f32 %v241, %v383
        %v386 = vmul.f32 %v242, %v383
        %v387 = vmul.f32 %v243, %v383
        %391 = vrot.lane.b32.xlu0 %v385, 92
        %v392 = vpop.permute.xlu0 %391
        %393 = vrot.lane.b32.xlu0 %v386, 92
        %v394 = vpop.permute.xlu0 %393
        %395 = vrot.lane.b32.xlu0 %v387, 92
        %v396 = vpop.permute.xlu0 %395
        %vm397 = vcmask 752640
        %v398 = vsel %vm397, %v392, %v394
        %v399 = vsel %vm397, %v394, %v396
        %v403 = vadd.f32 %v378, %v398
        %v404 = vadd.f32 %v379, %v399
        %v405 = vadd.f32 %v380, %v396
        %406 = vset.pattern.permute.xlu0 7
        %407 = vperm.xlu0 %406, %v244
        %v408 = vpop.permute.xlu0 %407
        %v410 = vmul.f32 %v241, %v408
        %v411 = vmul.f32 %v242, %v408
        %v412 = vmul.f32 %v243, %v408
        %416 = vrot.lane.b32.xlu0 %v410, 91
        %v417 = vpop.permute.xlu0 %416
        %418 = vrot.lane.b32.xlu0 %v411, 91
        %v419 = vpop.permute.xlu0 %418
        %420 = vrot.lane.b32.xlu0 %v412, 91
        %v421 = vpop.permute.xlu0 %420
        %vm422 = vcmask 744448
        %v423 = vsel %vm422, %v417, %v419
        %v424 = vsel %vm422, %v419, %v421
        %v428 = vadd.f32 %v403, %v423
        %v429 = vadd.f32 %v404, %v424
        %v430 = vadd.f32 %v405, %v421
        %431 = vset.pattern.permute.xlu0 8
        %432 = vperm.xlu0 %431, %v244
        %v433 = vpop.permute.xlu0 %432
        %v435 = vmul.f32 %v241, %v433
        %v436 = vmul.f32 %v242, %v433
        %v437 = vmul.f32 %v243, %v433
        %441 = vrot.lane.b32.xlu0 %v435, 90
        %v442 = vpop.permute.xlu0 %441
        %443 = vrot.lane.b32.xlu0 %v436, 90
        %v444 = vpop.permute.xlu0 %443
        %445 = vrot.lane.b32.xlu0 %v437, 90
        %v446 = vpop.permute.xlu0 %445
        %vm447 = vcmask 736256
        %v448 = vsel %vm447, %v442, %v444
        %v449 = vsel %vm447, %v444, %v446
        %v453 = vadd.f32 %v428, %v448
        %v454 = vadd.f32 %v429, %v449
        %v455 = vadd.f32 %v430, %v446
        %457 = vrot.lane.b32.xlu0 %v453, 126
        %v458 = vpop.permute.xlu0 %457
        %460 = vrot.lane.b32.xlu0 %v453, 124
        %v461 = vpop.permute.xlu0 %460
        %463 = vrot.lane.b32.xlu0 %v453, 122
        %v464 = vpop.permute.xlu0 %463
        %466 = vrot.lane.b32.xlu0 %v453, 120
        %v467 = vpop.permute.xlu0 %466
        %469 = vrot.lane.b32.xlu0 %v453, 118
        %v470 = vpop.permute.xlu0 %469
        %472 = vrot.lane.b32.xlu0 %v453, 116
        %v473 = vpop.permute.xlu0 %472
        %476 = vrot.lane.b32.xlu0 %v453, 114
        %v477 = vpop.permute.xlu0 %476
        %478 = vrot.lane.b32.xlu0 %v454, 114
        %v479 = vpop.permute.xlu0 %478
        %vm480 = vcmask 932864
        %v481 = vsel %vm480, %v477, %v479
        %483 = vrot.lane.b32.xlu0 %v454, 112
        %v484 = vpop.permute.xlu0 %483
        %486 = vrot.lane.b32.xlu0 %v454, 110
        %v487 = vpop.permute.xlu0 %486
        %489 = vrot.lane.b32.xlu0 %v454, 108
        %v490 = vpop.permute.xlu0 %489
        %492 = vrot.lane.b32.xlu0 %v454, 106
        %v493 = vpop.permute.xlu0 %492
        %495 = vrot.lane.b32.xlu0 %v454, 104
        %v496 = vpop.permute.xlu0 %495
        %498 = vrot.lane.b32.xlu0 %v454, 102
        %v499 = vpop.permute.xlu0 %498
        %502 = vrot.lane.b32.xlu0 %v454, 100
        %v503 = vpop.permute.xlu0 %502
        %504 = vrot.lane.b32.xlu0 %v455, 100
        %v505 = vpop.permute.xlu0 %504
        %vm506 = vcmask 818176
        %v507 = vsel %vm506, %v503, %v505
        %509 = vrot.lane.b32.xlu0 %v455, 98
        %v510 = vpop.permute.xlu0 %509
        %vm512 = vcmask 130048
        %v513 = vsel %vm512, %v453, %v458
        %vm514 = vcmask 261120
        %v515 = vsel %vm514, %v513, %v461
        %vm516 = vcmask 392192
        %v517 = vsel %vm516, %v515, %v464
        %vm518 = vcmask 523264
        %v519 = vsel %vm518, %v517, %v467
        %vm520 = vcmask 654336
        %v521 = vsel %vm520, %v519, %v470
        %vm522 = vcmask 785408
        %v523 = vsel %vm522, %v521, %v473
        %vm524 = vcmask 916480
        %v525 = vsel %vm524, %v523, %v481
        %v526 = vsel %vm512, %v484, %v487
        %v527 = vsel %vm514, %v526, %v490
        %v528 = vsel %vm516, %v527, %v493
        %v529 = vsel %vm518, %v528, %v496
        %v530 = vsel %vm520, %v529, %v499
        %v531 = vsel %vm522, %v530, %v507
        %v532 = vsel %vm524, %v531, %v510
        %v533 = vadd.f32 %v525, %v532
        %534 = vadd.xlane.f32.xlu0 %v533
        %v535 = vpop.xlane.xlu0 %534
        %v536 = vmul.f32 %v525, %v525
        %v537 = vmul.f32 %v532, %v532
        %v538 = vadd.f32 %v536, %v537
        %539 = vadd.xlane.f32.xlu0 %v538
        %v540 = vpop.xlane.xlu0 %539
        %v541 = vrcp.pop 256.0
        %v542 = vmul.f32 %v535, %v541
        %v543 = vmul.f32 %v540, %v541
        %v544 = vmul.f32 %v542, %v542
        %v545 = vsub.f32 %v543, %v544
        %v546 = vmax.f32 %v545, 0.0
        %v547 = vsub.f32 %v525, %v542
        %v548 = vsub.f32 %v532, %v542
        %v549 = vadd.f32 %v546, 1e-05
        %v550 = vrsqrt.pop %v549
        %v551 = vmul.f32 %v547, %v550
        %v552 = vmul.f32 %v548, %v550
        %v553 = vld [vmem:[%s2] sm:$0xff]
        %555 = vset.pattern.permute.xlu0 0
        %556 = vperm.xlu0 %555, %v553
        %v557 = vpop.permute.xlu0 %556
        %v559 = vmul.f32 %v551, %v557
        %v560 = vmul.f32 %v552, %v557
        %v561 = vld [vmem:[%s3] sm:$0xff]
        %563 = vset.pattern.permute.xlu0 0
        %564 = vperm.xlu0 %563, %v561
        %v565 = vpop.permute.xlu0 %564
        %v567 = vadd.f32 %v559, %v565
        %v568 = vadd.f32 %v560, %v565
        %v569 = vld [vmem:[%s4] sm:$0xff]
        %v570 = vld [vmem:[%s4 + $0x8] sm:$0xff]
        %vm571 = vcmask 64512
        %v573 = vsel %vm571, %v569, 0
        %v576 = vsel %vm571, %v570, 0
        %578 = vmatprep.subr.mxu0 %v568
        %579 = vmatpush1.msra.mxu0 %v567
        %580 = vmatprep.subr.mxu0 0.0
        %581 = vmatpush1.msra.mxu0 0.0
        %582 = vmatprep.subr.mxu0 0.0
        %583 = vmatpush1.msra.mxu0 0.0
        %584 = vmatprep.subr.mxu0 0.0
        %585 = vmatpush1.msra.mxu0 0.0
        %586 = vmatprep.subr.mxu0 0.0
        %587 = vmatpush1.msra.mxu0 0.0
        %588 = vmatprep.subr.mxu0 0.0
        %589 = vmatpush1.msra.mxu0 0.0
        %590 = vmatprep.subr.mxu0 0.0
        %591 = vmatpush1.msra.mxu0 0.0
        %592 = vmatprep.subr.mxu0 0.0
        %593 = vmatpush1.msra.mxu0 0.0
        %594 = vmatprep.subr.mxu0 0.0
        %595 = vmatpush1.msra.mxu0 0.0
        %596 = vmatprep.subr.mxu0 0.0
        %597 = vmatpush1.msra.mxu0 0.0
        %598 = vmatprep.subr.mxu0 0.0
        %599 = vmatpush1.msra.mxu0 0.0
        %600 = vmatprep.subr.mxu0 0.0
        %601 = vmatpush1.msra.mxu0 0.0
        %602 = vmatprep.subr.mxu0 0.0
        %603 = vmatpush1.msra.mxu0 0.0
        %604 = vmatprep.subr.mxu0 0.0
        %605 = vmatpush1.msra.mxu0 0.0
        %606 = vmatprep.subr.mxu0 0.0
        %607 = vmatpush1.msra.mxu0 0.0
        %608 = vmatprep.subr.mxu0 0.0
        %609 = vmatpush1.msra.mxu0 0.0
        %610 = vmatprep.subr.mxu0 0.0
        %611 = vmatpush1.msra.mxu0 0.0
        %612 = vmatprep.subr.mxu0 0.0
        %613 = vmatpush1.msra.mxu0 0.0
        %614 = vmatprep.subr.mxu0 0.0
        %615 = vmatpush1.msra.mxu0 0.0
        %616 = vmatprep.subr.mxu0 0.0
        %617 = vmatpush1.msra.mxu0 0.0
        %618 = vmatprep.subr.mxu0 0.0
        %619 = vmatpush1.msra.mxu0 0.0
        %620 = vmatprep.subr.mxu0 0.0
        %621 = vmatpush1.msra.mxu0 0.0
        %622 = vmatprep.subr.mxu0 0.0
        %623 = vmatpush1.msra.mxu0 0.0
        %624 = vmatprep.subr.mxu0 0.0
        %625 = vmatpush1.msra.mxu0 0.0
        %626 = vmatprep.subr.mxu0 0.0
        %627 = vmatpush1.msra.mxu0 0.0
        %628 = vmatprep.subr.mxu0 0.0
        %629 = vmatpush1.msra.mxu0 0.0
        %630 = vmatprep.subr.mxu0 0.0
        %631 = vmatpush1.msra.mxu0 0.0
        %632 = vmatprep.subr.mxu0 0.0
        %633 = vmatpush1.msra.mxu0 0.0
        %634 = vmatprep.subr.mxu0 0.0
        %635 = vmatpush1.msra.mxu0 0.0
        %636 = vmatprep.subr.mxu0 0.0
        %637 = vmatpush1.msra.mxu0 0.0
        %638 = vmatprep.subr.mxu0 0.0
        %639 = vmatpush1.msra.mxu0 0.0
        %640 = vmatprep.subr.mxu0 0.0
        %641 = vmatpush1.msra.mxu0 0.0
        %642 = vmatprep.mubr.f32.mxu0 0.0
        %643 = vmatmul.mubr.f32.gmra.mrb[0].mxu0 %v573
        %v644 = vpop.f32.mrb[0].mxu0
        %v645 = vadd.f32 0.0, %v644
        %v646 = vpop.f32.mrb[0].mxu0
        %v647 = vadd.f32 0.0, %v646
        %648 = vmatprep.mubr.f32.mxu0 0.0
        %649 = vmatmul.mubr.f32.gmra.mrb[0].mxu0 %v576
        %v650 = vpop.f32.mrb[0].mxu0
        %v651 = vadd.f32 0.0, %v650
        %v652 = vpop.f32.mrb[0].mxu0
        %v653 = vadd.f32 0.0, %v652
        %654 = vdwg.mxu0
        %655 = vst [vmem:[%s240] sm:$0xff] %v645
        %656 = vst [vmem:[%s240 + $0x8] sm:$0xff] %v647
        %657 = vst [vmem:[%s240 + $0x10] sm:$0xff] %v651
        %658 = vst [vmem:[%s240 + $0x18] sm:$0xff] %v653
        %s659 = sand.u32 %s140, 1
        %s660 = scalar_lea.sflag [#allocation4], %s659
        %s661 = sand.u32 %s140, 1
        %s662 = smul.addr %s661, 32
        %s663 = scalar_lea.vmem [#allocation5], %s662
        // Predicated region
        $region45: #{tpu_custom_call.1} parent=39 // pred_check
          %p664 = pneg %p150
        $region46: #{tpu_custom_call.1} parent=39 // pred_check_branch
          %666 = sbr.rel (%p664) target = $region48
        $region47: #{tpu_custom_call.1} parent=39 // pred_region
          %s668 = ssub.s32 512, 512
          %669 = vsyncadd %s660, %s668
          %s670 = smul.addr %s22, 4
          %s671 = smul.addr %s670, 128
          %s672 = scalar_lea.hbm %s5, %s671
          %s673 = sshll.u32 %s663, 4
          %s674 = int_to_ptr.vmem [resolvable:$true] %s673
          %679 = dma.vmem_to_hbm [thread:$0]  %s674, 512, %s672, %s660, 256, 256, 16
        $region48: #{tpu_custom_call.1} parent=39 // pred_fallthru
          _
      $region40: #{tpu_custom_call.1} parent=5 // pred_fallthru
        _
      %p680 = scmp.le.s32.totalorder 2, %s17
      // Predicated region
      $region49: #{tpu_custom_call.1} parent=5 // pred_check
        %p681 = pneg %p680
      $region50: #{tpu_custom_call.1} parent=5 // pred_check_branch
        %683 = sbr.rel (%p681) target = $region52
      $region51: #{tpu_custom_call.1} parent=5 // pred_region
        %s684 = ssub.s32 %s17, 2
        // Predicated region
        $region53: #{tpu_custom_call.1} parent=51 // pred_check
          %p685 = pneg %p156
        $region54: #{tpu_custom_call.1} parent=51 // pred_check_branch
          %687 = sbr.rel (%p685) target = $region56
        $region55: #{tpu_custom_call.1} parent=51 // pred_region
          %s688 = sand.u32 %s141, 1
          %s689 = scalar_lea.sflag [#allocation4], %s688
          %s690 = sand.u32 %s141, 1
          %s691 = smul.addr %s690, 32
          %s692 = scalar_lea.vmem [#allocation5], %s691
          %693 = dma.done %s689, 512
        $region56: #{tpu_custom_call.1} parent=51 // pred_fallthru
          _
      $region52: #{tpu_custom_call.1} parent=5 // pred_fallthru
        _
    $region6: #{tpu_custom_call.1} parent=1 // loop_footer
      %s21 = sadd.s32 1, %s17
    $region7: #{tpu_custom_call.1} parent=1 // loop_footer_branch
      %16 = sbr.rel target = $region3
    $region8: #{tpu_custom_call.1} parent=1 // loop_exit
      _
    %694 = vsyncpa [#allocation3], 1
    %s695 = scalar_lea.sflag [#allocation3], 1
    %696 = vsyncpa %s695, 1
    %697 = vsyncpa [#allocation4], 1
    %s698 = scalar_lea.sflag [#allocation4], 1
    %699 = vsyncpa %s698, 1

</llo_original>
